<compile_context>
chip_gen: v6e
topology: v6e:2x2x1
jax: 0.10.0
libtpu: 0.0.40
codegen_flags: <defaults>
</compile_context>

<pallas_src>
import functools

import jax
import jax.numpy as jnp
from jax.experimental import pallas as pl
from jax.experimental.pallas import tpu as pltpu


def _pa_kernel(x_ref, w1t_ref, b1_ref, w2_ref, b2_ref, o_ref):
    # x_ref: (C, TILE_P) pixel tile (channel-major). Weights/biases have
    # constant index maps so they stay resident in VMEM across grid steps.

    # 1x1 conv #1 (C -> C//8) + bias + ReLU on the MXU, math in f32.
    h = jnp.dot(w1t_ref[...], x_ref[...].astype(jnp.float32),
                preferred_element_type=jnp.float32)                     # (CR, TP)
    h = jnp.maximum(h + b1_ref[...], 0.0)

    # 1x1 conv #2 (C//8 -> 1) + bias + sigmoid as a sublane (VPU/XLU) reduce;
    # frees the MXU/result-FIFO for the (HBM-bound) kernel's only real matmul.
    y = jnp.sum(h * w2_ref[...], axis=0, keepdims=True) + b2_ref[...]   # (1, TP)
    y = jax.nn.sigmoid(y)

    # Pixel attention: per-pixel scalar broadcast over channels (sublanes).
    # Re-read x from the resident VMEM block for the store so no upcast copy
    # is held live across the matmul/reduce (matters for bf16 + large tiles).
    o_ref[...] = (x_ref[...].astype(jnp.float32) * y).astype(o_ref.dtype)


def _choose_tile_p(hw, c, n, dtype_bytes, *,
                   target_block_bytes=2 << 20,     # ~2 MiB per (C, TILE_P) block
                   max_block_bytes=4 << 20,        # keeps 2x(in+out) buffers < ~16 MiB
                   min_parallel_tiles=2):
    """Pick a lane-dense pixel tile sized by bytes, VMEM-safe on v7x/v6e/v5e."""
    hw_rounded = max(128, ((hw + 127) // 128) * 128)

    tile = target_block_bytes // max(1, c * dtype_bytes)
    tile = max(512, (tile // 128) * 128)

    # Hard cap on block footprint (large-C safety for v7x's 64 MiB VMEM).
    cap = max(128, (max_block_bytes // max(1, c * dtype_bytes) // 128) * 128)
    tile = min(tile, cap, hw_rounded)
    tile = max(tile, 128)

    # Megacore: keep at least `min_parallel_tiles` grid steps so both
    # TensorCores (v7x) get work even when N is tiny.
    while tile > 128 and n * (-(-hw // tile)) < min_parallel_tiles:
        tile = max(128, ((tile // 2 + 127) // 128) * 128)
    return tile


@functools.partial(jax.jit, static_argnames=("tile_p",))
def pa_layer(x, w1, b1, w2, b2, *, tile_p=None):
    """x: (N, C, H, W). w1: (C, C//8), b1: (C//8,), w2: (C//8, 1), b2: (1,).

    Weight layout is the (in, out) matmul equivalent of PyTorch's
    Conv2d(out, in, 1, 1).  Returns (N, C, H, W) in x.dtype."""
    n, c, h, w = x.shape
    cr = w1.shape[1]  # C // 8
    hw = h * w
    dtype_bytes = jnp.dtype(x.dtype).itemsize

    # NCHW -> (N, C, HW): contiguous reshape, no transpose, no extra HBM pass.
    x3 = x.reshape(n, c, hw)

    if tile_p is None:
        tile_p = _choose_tile_p(hw, c, n, dtype_bytes)
    num_tiles = pl.cdiv(hw, tile_p)   # ragged last block handled by Pallas masking

    # Tiny weights, kept in f32 (accurate math on all generations incl. v5e).
    w1t = jnp.transpose(w1).astype(jnp.float32)        # (CR, C)
    b1_2d = b1.reshape(cr, 1).astype(jnp.float32)      # (CR, 1)
    w2_2d = w2.reshape(cr, 1).astype(jnp.float32)      # (CR, 1)
    b2_2d = b2.reshape(1, 1).astype(jnp.float32)       # (1, 1)

    # VMEM limit derived from the chosen tile: 2 pipeline buffers x (in + out)
    # blocks + headroom; stays far under v7x's 32 MiB scoped default.
    block_bytes = c * tile_p * dtype_bytes
    vmem_limit = int(min(max(4 * block_bytes + (2 << 20), 8 << 20), 32 << 20))

    cost = pl.CostEstimate(
        flops=int(2 * n * hw * (c * cr + cr) + n * hw * c),
        transcendentals=int(n * hw),                       # sigmoid per pixel
        bytes_accessed=int(2 * n * c * hw * dtype_bytes),  # read x + write out
    )

    out3 = pl.pallas_call(
        _pa_kernel,
        out_shape=jax.ShapeDtypeStruct((n, c, hw), x.dtype),
        grid_spec=pltpu.PrefetchScalarGridSpec(
            num_scalar_prefetch=0,
            grid=(n, num_tiles),
            in_specs=[
                pl.BlockSpec((None, c, tile_p), lambda b, i: (b, 0, i)),  # x tile
                pl.BlockSpec((cr, c), lambda b, i: (0, 0)),               # w1^T (resident)
                pl.BlockSpec((cr, 1), lambda b, i: (0, 0)),               # b1
                pl.BlockSpec((cr, 1), lambda b, i: (0, 0)),               # w2
                pl.BlockSpec((1, 1), lambda b, i: (0, 0)),                # b2
            ],
            out_specs=pl.BlockSpec((None, c, tile_p), lambda b, i: (b, 0, i)),
        ),
        compiler_params=pltpu.CompilerParams(
            dimension_semantics=("parallel", "parallel"),   # megacore on v7x
            vmem_limit_bytes=vmem_limit,
        ),
        cost_estimate=cost,
    )(x3, w1t, b1_2d, w2_2d, b2_2d)

    return out3.reshape(n, c, h, w)


def _reference(x, w1, b1, w2, b2):
    # Pure-JAX reference of the PyTorch forward (NCHW, 1x1 convs as matmuls).
    n, c, h, w = x.shape
    xf = jnp.transpose(x, (0, 2, 3, 1)).reshape(-1, c)
    hdn = jnp.maximum(xf @ w1 + b1[None, :], 0.0)
    y = jax.nn.sigmoid(hdn @ w2 + b2[None, :])          # (P, 1)
    out = xf * y
    return jnp.transpose(out.reshape(n, h, w, c), (0, 3, 1, 2))


if __name__ == "__main__":
    # TODO(synk): the PyTorch forward's `print('y.shape', ...)` debug print is
    # intentionally not reproduced in the kernel.
    N, C, H, W = 2, 16, 16, 16
    CR = C // 8

    key = jax.random.PRNGKey(0)
    kx, k1, k2, k3, k4 = jax.random.split(key, 5)

    x = jax.random.normal(kx, (N, C, H, W), dtype=jnp.float32)

    # PyTorch Conv2d weight is (out, in, 1, 1); we store the equivalent
    # (in, out) matmul weights directly.
    w1 = jax.random.normal(k1, (C, CR), dtype=jnp.float32) * 0.1
    b1 = jax.random.normal(k2, (CR,), dtype=jnp.float32) * 0.1
    w2 = jax.random.normal(k3, (CR, 1), dtype=jnp.float32) * 0.1
    b2 = jax.random.normal(k4, (1,), dtype=jnp.float32) * 0.1

    out = jax.block_until_ready(pa_layer(x, w1, b1, w2, b2))
    ref = _reference(x, w1, b1, w2, b2)
    assert out.shape == x.shape
    assert jnp.allclose(out, ref, atol=1e-5, rtol=1e-5), "mismatch vs reference"

    # Non-divisible spatial extent (HW=117): pad-free ragged last block.
    x_odd = jax.random.normal(kx, (N, C, 9, 13), dtype=jnp.float32)
    out_odd = jax.block_until_ready(pa_layer(x_odd, w1, b1, w2, b2))
    assert jnp.allclose(out_odd, _reference(x_odd, w1, b1, w2, b2),
                        atol=1e-5, rtol=1e-5), "mismatch vs reference (ragged tail)"

    # bf16 I/O path (math stays in f32 inside the kernel).
    x_bf16 = x.astype(jnp.bfloat16)
    out_bf16 = jax.block_until_ready(pa_layer(x_bf16, w1, b1, w2, b2))
    assert out_bf16.dtype == jnp.bfloat16
    ref_bf16 = _reference(x_bf16.astype(jnp.float32), w1, b1, w2, b2)
    assert jnp.allclose(out_bf16.astype(jnp.float32), ref_bf16,
                        atol=2e-2, rtol=2e-2), "mismatch vs reference (bf16)"

    print("KERNEL_OK")
</pallas_src>

<mosaic_0001>
module attributes {stable_mosaic.version = 11 : i64} {
  func.func @_pa_kernel(%arg0: i32, %arg1: i32, %arg2: memref<1x16x256xf32, #tpu.memory_space<vmem>>, %arg3: memref<2x16xf32, #tpu.memory_space<vmem>>, %arg4: memref<2x1xf32, #tpu.memory_space<vmem>>, %arg5: memref<2x1xf32, #tpu.memory_space<vmem>>, %arg6: memref<1x1xf32, #tpu.memory_space<vmem>>, %arg7: memref<1x16x256xf32, #tpu.memory_space<vmem>>) attributes {dimension_semantics = [#tpu.dimension_semantics<parallel>, #tpu.dimension_semantics<parallel>], iteration_bounds = array<i64: 2, 1>, scalar_prefetch = 0 : i64, scratch_operands = 0 : i64, tpu.core_type = #tpu.core_type<tc>, window_params = [{transform_indices = @transform_0, window_bounds = array<i64: 1, 16, 256>}, {pipeline_mode = #tpu.pipeline_mode<synchronous>, transform_indices = @transform_1, window_bounds = array<i64: 2, 16>}, {pipeline_mode = #tpu.pipeline_mode<synchronous>, transform_indices = @transform_2, window_bounds = array<i64: 2, 1>}, {pipeline_mode = #tpu.pipeline_mode<synchronous>, transform_indices = @transform_3, window_bounds = array<i64: 2, 1>}, {pipeline_mode = #tpu.pipeline_mode<synchronous>, transform_indices = @transform_4, window_bounds = array<i64: 1, 1>}, {transform_indices = @transform_5, window_bounds = array<i64: 1, 16, 256>}]} {
    %c0 = arith.constant 0 : index
    %c0_0 = arith.constant 0 : index
    %0 = vector.load %arg3[%c0, %c0_0] : memref<2x16xf32, #tpu.memory_space<vmem>>, vector<2x16xf32>
    %c0_1 = arith.constant 0 : index
    %c0_2 = arith.constant 0 : index
    %c0_3 = arith.constant 0 : index
    %1 = vector.load %arg2[%c0_1, %c0_2, %c0_3] : memref<1x16x256xf32, #tpu.memory_space<vmem>>, vector<1x16x256xf32>
    %2 = vector.shape_cast %1 : vector<1x16x256xf32> to vector<16x256xf32>
    %cst = arith.constant dense<0.000000e+00> : vector<2x256xf32>
    %3 = tpu.matmul %0, %2, %cst {dimension_numbers = #tpu.dot_dimension_numbers<[1], [0], [0], [1], [0, 0, 1, 1], [], []>} : vector<2x16xf32>, vector<16x256xf32>, vector<2x256xf32> -> vector<2x256xf32>
    %c0_4 = arith.constant 0 : index
    %c0_5 = arith.constant 0 : index
    %4 = vector.load %arg4[%c0_4, %c0_5] : memref<2x1xf32, #tpu.memory_space<vmem>>, vector<2x1xf32>
    %5 = vector.broadcast %4 : vector<2x1xf32> to vector<2x256xf32>
    %6 = arith.addf %3, %5 : vector<2x256xf32>
    %cst_6 = arith.constant 0.000000e+00 : f32
    %7 = vector.broadcast %cst_6 : f32 to vector<2x256xf32>
    %8 = arith.maximumf %6, %7 : vector<2x256xf32>
    %c0_7 = arith.constant 0 : index
    %c0_8 = arith.constant 0 : index
    %9 = vector.load %arg5[%c0_7, %c0_8] : memref<2x1xf32, #tpu.memory_space<vmem>>, vector<2x1xf32>
    %10 = vector.broadcast %9 : vector<2x1xf32> to vector<2x256xf32>
    %11 = arith.mulf %8, %10 : vector<2x256xf32>
    %cst_9 = arith.constant dense<0.000000e+00> : vector<256xf32>
    %12 = vector.multi_reduction <add>, %11, %cst_9 [0] : vector<2x256xf32> to vector<256xf32>
    %13 = vector.shape_cast %12 : vector<256xf32> to vector<1x256xf32>
    %c0_10 = arith.constant 0 : index
    %c0_11 = arith.constant 0 : index
    %14 = vector.load %arg6[%c0_10, %c0_11] : memref<1x1xf32, #tpu.memory_space<vmem>>, vector<1x1xf32>
    %15 = vector.broadcast %14 : vector<1x1xf32> to vector<1x256xf32>
    %16 = arith.addf %13, %15 : vector<1x256xf32>
    %17 = arith.negf %16 : vector<1x256xf32>
    %18 = math.exp %17 : vector<1x256xf32>
    %cst_12 = arith.constant 1.000000e+00 : f32
    %19 = vector.broadcast %cst_12 : f32 to vector<1x256xf32>
    %20 = arith.addf %19, %18 : vector<1x256xf32>
    %21 = arith.divf %19, %20 : vector<1x256xf32>
    %c0_13 = arith.constant 0 : index
    %c0_14 = arith.constant 0 : index
    %c0_15 = arith.constant 0 : index
    %22 = vector.load %arg2[%c0_13, %c0_14, %c0_15] : memref<1x16x256xf32, #tpu.memory_space<vmem>>, vector<1x16x256xf32>
    %23 = vector.shape_cast %22 : vector<1x16x256xf32> to vector<16x256xf32>
    %24 = vector.broadcast %21 : vector<1x256xf32> to vector<16x256xf32>
    %25 = arith.mulf %23, %24 : vector<16x256xf32>
    %c0_16 = arith.constant 0 : index
    %c0_17 = arith.constant 0 : index
    %c0_18 = arith.constant 0 : index
    %26 = vector.load %arg7[%c0_16, %c0_17, %c0_18] : memref<1x16x256xf32, #tpu.memory_space<vmem>>, vector<1x16x256xf32>
    %27 = vector.shape_cast %26 : vector<1x16x256xf32> to vector<16x256xf32>
    %28 = vector.shape_cast %25 : vector<16x256xf32> to vector<1x16x256xf32>
    tpu.vector_store %arg7[%c0_16, %c0_17, %c0_18], %28 {strides = array<i32>} : memref<1x16x256xf32, #tpu.memory_space<vmem>>, vector<1x16x256xf32>,
    return
  }
  func.func @transform_0(%arg0: i32, %arg1: i32) -> (i32, i32, i32) {
    %c0_i32 = arith.constant 0 : i32
    %c0_i32_0 = arith.constant 0 : i32
    return %arg0, %c0_i32, %arg1 : i32, i32, i32
  }
  func.func @transform_1(%arg0: i32, %arg1: i32) -> (i32, i32) {
    %c0_i32 = arith.constant 0 : i32
    %c0_i32_0 = arith.constant 0 : i32
    %c0_i32_1 = arith.constant 0 : i32
    return %c0_i32, %c0_i32_0 : i32, i32
  }
  func.func @transform_2(%arg0: i32, %arg1: i32) -> (i32, i32) {
    %c0_i32 = arith.constant 0 : i32
    %c0_i32_0 = arith.constant 0 : i32
    %c0_i32_1 = arith.constant 0 : i32
    return %c0_i32, %c0_i32_0 : i32, i32
  }
  func.func @transform_3(%arg0: i32, %arg1: i32) -> (i32, i32) {
    %c0_i32 = arith.constant 0 : i32
    %c0_i32_0 = arith.constant 0 : i32
    %c0_i32_1 = arith.constant 0 : i32
    return %c0_i32, %c0_i32_0 : i32, i32
  }
  func.func @transform_4(%arg0: i32, %arg1: i32) -> (i32, i32) {
    %c0_i32 = arith.constant 0 : i32
    %c0_i32_0 = arith.constant 0 : i32
    %c0_i32_1 = arith.constant 0 : i32
    return %c0_i32, %c0_i32_0 : i32, i32
  }
  func.func @transform_5(%arg0: i32, %arg1: i32) -> (i32, i32, i32) {
    %c0_i32 = arith.constant 0 : i32
    %c0_i32_0 = arith.constant 0 : i32
    return %arg0, %c0_i32, %arg1 : i32, i32, i32
  }
}

</mosaic_0001>

<llo_original>
// kernel: pa_layer.1
$region0: #{pa_layer.1}
  #allocation0 [shape = 'u32[]', space=smem, size = 0x4, offset = 0x4, fixed_abs, tag = 'smem constant byte address 0x4 - core index']
  #allocation1 [shape = 'u32[144,128]{1,0:T(1,128)}', space=vmem, size = 0x12000, scoped, tag = 'internal scratch']
  #allocation2 [shape = 'f32[1,1]{1,0:T(1,128)S(1)}', space=vmem, size = 0x200, scoped, tag = 'scoped memory for pa_layer.1']
  %s0 = inlined_call_operand.vmem [shape: f32[2,16,256], index: 0, kind: input, shape index: {}]
  %s1 = inlined_call_operand.vmem [shape: f32[2,16], index: 1, kind: input, shape index: {}]
  %s2 = inlined_call_operand.vmem [shape: f32[2,1], index: 2, kind: input, shape index: {}]
  %s3 = inlined_call_operand.vmem [shape: f32[2,1], index: 3, kind: input, shape index: {}]
  %s4 = inlined_call_operand.<no memory space> [shape: f32[1,1], index: 4, kind: input, shape index: {}]
  %s5 = inlined_call_operand.vmem [shape: f32[2,16,256], index: 5, kind: output, shape index: {}]
  %s6 = sld [smem:[#allocation0]]
  $region53: #{pa_layer.1} parent=0
    _
  %s8 = ssub.s32 1, %s6
  %s9 = scalar_select 0, %s8, %s6
  %v10 = vstv %s4
  %11 = vst [vmem:[#allocation2] sm:$0x1] %v10
  loop: start=0, step=1, limit=4
  $region2: #{pa_layer.1} parent=0 // loop_pre_header
    _
  $region3: #{pa_layer.1} parent=0 // loop_header
    %s13 = sphi 0, %s17
    %p14 = scmp.ge.s32.totalorder %s13, 4
    %s20 = sphi 0, %s32
    %s21 = sphi 0, %s28
    %s22 = sphi 0, %s20
    %s23 = sphi 0, %s21
    %s24 = sphi 0, %s22
    %s25 = sphi 0, %s23
    %s37 = sphi 0, %s39
    %s40 = sphi 0, %s37
    %s41 = sphi 0, %s40
    %s57 = sphi 0, %s41
    %s61 = sphi 0, %s61
    %s63 = sphi 0, %s61
    %s64 = sphi 0, %s63
    %s78 = sphi 0, %s64
    %s82 = sphi 0, %s82
    %s84 = sphi 0, %s82
    %s85 = sphi 0, %s84
    %s99 = sphi 0, %s85
    %s103 = sphi 0, %s103
    %s105 = sphi 0, %s103
    %s106 = sphi 0, %s105
    %s120 = sphi 0, %s106
    %s124 = sphi 0, %s124
    %s126 = sphi 0, %s124
    %s127 = sphi 0, %s126
    %s141 = sphi 0, %s127
    %s149 = sphi 0, %s151
    %s152 = sphi 0, %s149
    %s153 = sphi 0, %s152
    %s169 = sphi 0, %s153
  $region4: #{pa_layer.1} parent=0 // loop_header_branch
    %16 = sbr.rel (%p14) target = $region8
  $region5: #{pa_layer.1} parent=0 // loop_body
    %s18 = ssub.s32 %s13, 1
    %s19 = ssub.s32 %s13, 2
    %s26 = sadd.s32 1, %s21
    %p27 = scmp.ge.s32.totalorder %s26, 1
    %s28 = scalar_select %p27, 0, %s26
    %s29 = sadd.s32 1, %s20
    %s30 = scalar_select %p27, %s29, %s20
    %p31 = scmp.ge.s32.totalorder %s30, 2
    %s32 = scalar_select %p31, 0, %s30
    %s33 = ssub.s32 %s20, %s32
    %s34 = ssub.s32 %s21, %s28
    %s35 = sor.u32 %s33, %s34
    %p36 = scmp.eq.s32.totalorder %s35, 0
    %s38 = sadd.s32 %s37, 1
    %s39 = scalar_select %p36, %s37, %s38
    %p42 = pneg %p36
    %p43 = scmp.eq.s32.totalorder %s13, 1
    %p44 = por %p42, %p43
    %p45 = scmp.ne.s32.totalorder %s37, %s40
    %p46 = scmp.eq.s32.totalorder %s13, 0
    %p47 = por %p45, %p46
    %p48 = scmp.ne.s32.totalorder %s37, %s40
    %p49 = scmp.eq.s32.totalorder %s18, 1
    %p50 = por %p48, %p49
    %p51 = scmp.ne.s32.totalorder %s40, %s41
    %p52 = scmp.eq.s32.totalorder %s18, 0
    %p53 = por %p51, %p52
    %p54 = scmp.ne.s32.totalorder %s40, %s41
    %p55 = scmp.eq.s32.totalorder %s19, 1
    %p56 = por %p54, %p55
    %p58 = scmp.ne.s32.totalorder %s41, %s57
    %p59 = scmp.eq.s32.totalorder %s19, 0
    %p60 = por %p58, %p59
    %s62 = sadd.s32 %s61, 1
    %p65 = scmp.eq.s32.totalorder %s13, 1
    %p66 = scmp.ne.s32.totalorder %s61, %s63
    %p67 = scmp.eq.s32.totalorder %s13, 0
    %p68 = por %p66, %p67
    %p69 = scmp.ne.s32.totalorder %s61, %s63
    %p70 = scmp.eq.s32.totalorder %s18, 1
    %p71 = por %p69, %p70
    %p72 = scmp.ne.s32.totalorder %s63, %s64
    %p73 = scmp.eq.s32.totalorder %s18, 0
    %p74 = por %p72, %p73
    %p75 = scmp.ne.s32.totalorder %s63, %s64
    %p76 = scmp.eq.s32.totalorder %s19, 1
    %p77 = por %p75, %p76
    %p79 = scmp.ne.s32.totalorder %s64, %s78
    %p80 = scmp.eq.s32.totalorder %s19, 0
    %p81 = por %p79, %p80
    %s83 = sadd.s32 %s82, 1
    %p86 = scmp.eq.s32.totalorder %s13, 1
    %p87 = scmp.ne.s32.totalorder %s82, %s84
    %p88 = scmp.eq.s32.totalorder %s13, 0
    %p89 = por %p87, %p88
    %p90 = scmp.ne.s32.totalorder %s82, %s84
    %p91 = scmp.eq.s32.totalorder %s18, 1
    %p92 = por %p90, %p91
    %p93 = scmp.ne.s32.totalorder %s84, %s85
    %p94 = scmp.eq.s32.totalorder %s18, 0
    %p95 = por %p93, %p94
    %p96 = scmp.ne.s32.totalorder %s84, %s85
    %p97 = scmp.eq.s32.totalorder %s19, 1
    %p98 = por %p96, %p97
    %p100 = scmp.ne.s32.totalorder %s85, %s99
    %p101 = scmp.eq.s32.totalorder %s19, 0
    %p102 = por %p100, %p101
    %s104 = sadd.s32 %s103, 1
    %p107 = scmp.eq.s32.totalorder %s13, 1
    %p108 = scmp.ne.s32.totalorder %s103, %s105
    %p109 = scmp.eq.s32.totalorder %s13, 0
    %p110 = por %p108, %p109
    %p111 = scmp.ne.s32.totalorder %s103, %s105
    %p112 = scmp.eq.s32.totalorder %s18, 1
    %p113 = por %p111, %p112
    %p114 = scmp.ne.s32.totalorder %s105, %s106
    %p115 = scmp.eq.s32.totalorder %s18, 0
    %p116 = por %p114, %p115
    %p117 = scmp.ne.s32.totalorder %s105, %s106
    %p118 = scmp.eq.s32.totalorder %s19, 1
    %p119 = por %p117, %p118
    %p121 = scmp.ne.s32.totalorder %s106, %s120
    %p122 = scmp.eq.s32.totalorder %s19, 0
    %p123 = por %p121, %p122
    %s125 = sadd.s32 %s124, 1
    %p128 = scmp.eq.s32.totalorder %s13, 1
    %p129 = scmp.ne.s32.totalorder %s124, %s126
    %p130 = scmp.eq.s32.totalorder %s13, 0
    %p131 = por %p129, %p130
    %p132 = scmp.ne.s32.totalorder %s124, %s126
    %p133 = scmp.eq.s32.totalorder %s18, 1
    %p134 = por %p132, %p133
    %p135 = scmp.ne.s32.totalorder %s126, %s127
    %p136 = scmp.eq.s32.totalorder %s18, 0
    %p137 = por %p135, %p136
    %p138 = scmp.ne.s32.totalorder %s126, %s127
    %p139 = scmp.eq.s32.totalorder %s19, 1
    %p140 = por %p138, %p139
    %p142 = scmp.ne.s32.totalorder %s127, %s141
    %p143 = scmp.eq.s32.totalorder %s19, 0
    %p144 = por %p142, %p143
    %s145 = ssub.s32 %s20, %s32
    %s146 = ssub.s32 %s21, %s28
    %s147 = sor.u32 %s145, %s146
    %p148 = scmp.eq.s32.totalorder %s147, 0
    %s150 = sadd.s32 %s149, 1
    %s151 = scalar_select %p148, %s149, %s150
    %p154 = pneg %p148
    %p155 = scmp.eq.s32.totalorder %s13, 1
    %p156 = por %p154, %p155
    %p157 = scmp.ne.s32.totalorder %s149, %s152
    %p158 = scmp.eq.s32.totalorder %s13, 0
    %p159 = por %p157, %p158
    %p160 = scmp.ne.s32.totalorder %s149, %s152
    %p161 = scmp.eq.s32.totalorder %s18, 1
    %p162 = por %p160, %p161
    %p163 = scmp.ne.s32.totalorder %s152, %s153
    %p164 = scmp.eq.s32.totalorder %s18, 0
    %p165 = por %p163, %p164
    %p166 = scmp.ne.s32.totalorder %s152, %s153
    %p167 = scmp.eq.s32.totalorder %s19, 1
    %p168 = por %p166, %p167
    %p170 = scmp.ne.s32.totalorder %s153, %s169
    %p171 = scmp.eq.s32.totalorder %s19, 0
    %p172 = por %p170, %p171
    %p173 = scmp.le.s32.totalorder 1, %s13
    %p174 = scmp.lt.s32.totalorder %s13, 3
    %p175 = pnand %p173, %p174
    %p176 = pneg %p175
    // Predicated region
    $region9: #{pa_layer.1} parent=5 // pred_check
      _
    $region10: #{pa_layer.1} parent=5 // pred_check_branch
      %178 = sbr.rel (%p175) target = $region12
    $region11: #{pa_layer.1} parent=5 // pred_region
      %s179 = ssub.s32 %s13, 1
      // Predicated region
      $region13: #{pa_layer.1} parent=11 // pred_check
        %p180 = pneg %p74
      $region14: #{pa_layer.1} parent=11 // pred_check_branch
        %182 = sbr.rel (%p180) target = $region16
      $region15: #{pa_layer.1} parent=11 // pred_region
        _
      $region16: #{pa_layer.1} parent=11 // pred_fallthru
        _
      // Predicated region
      $region17: #{pa_layer.1} parent=11 // pred_check
        %p183 = pneg %p95
      $region18: #{pa_layer.1} parent=11 // pred_check_branch
        %185 = sbr.rel (%p183) target = $region20
      $region19: #{pa_layer.1} parent=11 // pred_region
        _
      $region20: #{pa_layer.1} parent=11 // pred_fallthru
        _
      // Predicated region
      $region21: #{pa_layer.1} parent=11 // pred_check
        %p186 = pneg %p116
      $region22: #{pa_layer.1} parent=11 // pred_check_branch
        %188 = sbr.rel (%p186) target = $region24
      $region23: #{pa_layer.1} parent=11 // pred_region
        _
      $region24: #{pa_layer.1} parent=11 // pred_fallthru
        _
      // Predicated region
      $region25: #{pa_layer.1} parent=11 // pred_check
        %p189 = pneg %p137
      $region26: #{pa_layer.1} parent=11 // pred_check_branch
        %191 = sbr.rel (%p189) target = $region28
      $region27: #{pa_layer.1} parent=11 // pred_region
        _
      $region28: #{pa_layer.1} parent=11 // pred_fallthru
        _
    $region12: #{pa_layer.1} parent=5 // pred_fallthru
      _
    %p192 = scmp.lt.s32.totalorder %s13, 2
    // Predicated region
    $region29: #{pa_layer.1} parent=5 // pred_check
      %p193 = pneg %p192
    $region30: #{pa_layer.1} parent=5 // pred_check_branch
      %195 = sbr.rel (%p193) target = $region32
    $region31: #{pa_layer.1} parent=5 // pred_region
      // Predicated region
      $region33: #{pa_layer.1} parent=31 // pred_check
        %p196 = pneg %p47
      $region34: #{pa_layer.1} parent=31 // pred_check_branch
        %198 = sbr.rel (%p196) target = $region36
      $region35: #{pa_layer.1} parent=31 // pred_region
        %s199 = smul.u32 2, %s21
        %p200 = scmp.lt.s32.totalorder %s20, 1
        %s201 = scalar_select %p200, %s20, 1
        %p202 = scmp.lt.s32.totalorder %s199, 1
        %s203 = scalar_select %p202, %s199, 1
        %s204 = smul.addr %s201, 4
        %s205 = sadd.s32 %s203, %s204
        %s206 = smul.addr %s205, 8
        %s207 = scalar_lea.vmem %s0, %s206
        %s208 = smul.u32 2, %s21
      $region36: #{pa_layer.1} parent=31 // pred_fallthru
        _
    $region32: #{pa_layer.1} parent=5 // pred_fallthru
      _
    %p209 = scmp.le.s32.totalorder 1, %s13
    %p210 = scmp.lt.s32.totalorder %s13, 3
    %p211 = pnand %p209, %p210
    %p212 = pneg %p211
    // Predicated region
    $region37: #{pa_layer.1} parent=5 // pred_check
      _
    $region38: #{pa_layer.1} parent=5 // pred_check_branch
      %214 = sbr.rel (%p211) target = $region40
    $region39: #{pa_layer.1} parent=5 // pred_region
      %s215 = ssub.s32 %s13, 1
      %s216 = smul.u32 2, %s23
      %p217 = scmp.lt.s32.totalorder %s22, 1
      %s218 = scalar_select %p217, %s22, 1
      %p219 = scmp.lt.s32.totalorder %s216, 1
      %s220 = scalar_select %p219, %s216, 1
      %s221 = smul.addr %s218, 4
      %s222 = sadd.s32 %s220, %s221
      %s223 = smul.addr %s222, 8
      %s224 = scalar_lea.vmem %s0, %s223
      %p225 = pneg %p53
      %p226 = pneg %p50
      %p227 = pneg %p74
      %p228 = pneg %p71
      %p229 = pneg %p95
      %p230 = pneg %p92
      %p231 = pneg %p116
      %p232 = pneg %p113
      %p233 = pneg %p137
      %p234 = pneg %p134
      %p235 = pneg %p165
      %p236 = pneg %p162
      %s237 = smul.u32 2, %s23
      %p238 = scmp.lt.s32.totalorder %s22, 1
      %s239 = scalar_select %p238, %s22, 1
      %p240 = scmp.lt.s32.totalorder %s237, 1
      %s241 = scalar_select %p240, %s237, 1
      %s242 = smul.addr %s239, 4
      %s243 = sadd.s32 %s241, %s242
      %s244 = smul.addr %s243, 8
      %s245 = scalar_lea.vmem %s5, %s244
      %s246 = smul.u32 2, %s23
      %p247 = scmp.lt.s32.totalorder %s22, 1
      %s248 = scalar_select %p247, %s22, 1
      %p249 = scmp.lt.s32.totalorder %s246, 1
      %s250 = scalar_select %p249, %s246, 1
      %s251 = smul.addr %s248, 4
      %s252 = sadd.s32 %s250, %s251
      %s253 = smul.addr %s252, 8
      %s254 = scalar_lea.vmem %s0, %s253
      %s255 = smul.u32 2, %s23
      %s256 = smul.u32 2, %s23
      %p257 = scmp.lt.s32.totalorder %s22, 1
      %s258 = scalar_select %p257, %s22, 1
      %p259 = scmp.lt.s32.totalorder %s256, 1
      %s260 = scalar_select %p259, %s256, 1
      %s261 = smul.addr %s258, 4
      %s262 = sadd.s32 %s260, %s261
      %s263 = smul.addr %s262, 8
      %s264 = scalar_lea.vmem %s5, %s263
      %s265 = smul.u32 2, %s23
      %v266 = vld [vmem:[%s1] sm:$0x3]
      %v267 = vld [vmem:[%s254] sm:$0xff]
      %v268 = vld [vmem:[%s254 + $0x8] sm:$0xff]
      %v269 = vld [vmem:[%s254 + $0x10] sm:$0xff]
      %v270 = vld [vmem:[%s254 + $0x18] sm:$0xff]
      %v271 = vld [vmem:[%s2] sm:$0x3]
      %273 = vset.pattern.permute.xlu0 0
      %274 = vperm.xlu0 %273, %v271
      %v275 = vpop.permute.xlu0 %274
      %vm277 = vcmask 130048
      %v279 = vsel %vm277, %v266, 0
      %281 = vmatprep.subr.mxu0 0.0
      %282 = vmatpush1.msra.mxu0 0.0
      %283 = vmatprep.subr.mxu0 0.0
      %284 = vmatpush1.msra.mxu0 0.0
      %285 = vmatprep.subr.mxu0 0.0
      %286 = vmatpush1.msra.mxu0 0.0
      %287 = vmatprep.subr.mxu0 0.0
      %288 = vmatpush1.msra.mxu0 0.0
      %289 = vmatprep.subr.mxu0 0.0
      %290 = vmatpush1.msra.mxu0 0.0
      %291 = vmatprep.subr.mxu0 0.0
      %292 = vmatpush1.msra.mxu0 0.0
      %293 = vmatprep.subr.mxu0 0.0
      %294 = vmatpush1.msra.mxu0 0.0
      %295 = vmatprep.subr.mxu0 0.0
      %296 = vmatpush1.msra.mxu0 0.0
      %297 = vmatprep.subr.mxu0 0.0
      %298 = vmatpush1.msra.mxu0 0.0
      %299 = vmatprep.subr.mxu0 0.0
      %300 = vmatpush1.msra.mxu0 0.0
      %301 = vmatprep.subr.mxu0 0.0
      %302 = vmatpush1.msra.mxu0 0.0
      %303 = vmatprep.subr.mxu0 0.0
      %304 = vmatpush1.msra.mxu0 0.0
      %305 = vmatprep.subr.mxu0 0.0
      %306 = vmatpush1.msra.mxu0 0.0
      %307 = vmatprep.subr.mxu0 0.0
      %308 = vmatpush1.msra.mxu0 0.0
      %309 = vmatprep.subr.mxu0 %v270
      %310 = vmatpush1.msra.mxu0 %v269
      %311 = vmatprep.subr.mxu0 %v268
      %312 = vmatpush1.msra.mxu0 %v267
      %313 = vmatprep.subr.mxu0 0.0
      %314 = vmatpush2.msra.mxu0 0.0
      %315 = vmatprep.subr.mxu0 0.0
      %316 = vmatpush2.msra.mxu0 0.0
      %317 = vmatprep.subr.mxu0 0.0
      %318 = vmatpush2.msra.mxu0 0.0
      %319 = vmatprep.subr.mxu0 0.0
      %320 = vmatpush2.msra.mxu0 0.0
      %321 = vmatprep.subr.mxu0 0.0
      %322 = vmatpush2.msra.mxu0 0.0
      %323 = vmatprep.subr.mxu0 0.0
      %324 = vmatpush2.msra.mxu0 0.0
      %325 = vmatprep.subr.mxu0 0.0
      %326 = vmatpush2.msra.mxu0 0.0
      %327 = vmatprep.subr.mxu0 0.0
      %328 = vmatpush2.msra.mxu0 0.0
      %329 = vmatprep.subr.mxu0 0.0
      %330 = vmatpush2.msra.mxu0 0.0
      %331 = vmatprep.subr.mxu0 0.0
      %332 = vmatpush2.msra.mxu0 0.0
      %333 = vmatprep.subr.mxu0 0.0
      %334 = vmatpush2.msra.mxu0 0.0
      %335 = vmatprep.subr.mxu0 0.0
      %336 = vmatpush2.msra.mxu0 0.0
      %337 = vmatprep.subr.mxu0 0.0
      %338 = vmatpush2.msra.mxu0 0.0
      %339 = vmatprep.subr.mxu0 0.0
      %340 = vmatpush2.msra.mxu0 0.0
      %341 = vmatprep.subr.mxu0 0.0
      %342 = vmatpush2.msra.mxu0 0.0
      %343 = vmatprep.subr.mxu0 0.0
      %344 = vmatpush2.msra.mxu0 0.0
      %345 = vmatprep.mubr.f32.mxu0 0.0
      %346 = vmatmul.mubr.f32.gmra.mxu0 %v279
      %v347 = vpop.f32.mrf.mxu0
      %v348 = vadd.f32 %v275, %v347
      %v349 = vpop.f32.mrf.mxu0
      %v350 = vadd.f32 %v275, %v349
      %351 = vdwg.mxu0
      %v352 = vmax.f32 %v348, 0.0
      %v353 = vmax.f32 %v350, 0.0
      %v354 = vld [vmem:[%s3] sm:$0x3]
      %356 = vset.pattern.permute.xlu0 0
      %357 = vperm.xlu0 %356, %v354
      %v358 = vpop.permute.xlu0 %357
      %v360 = vmul.f32 %v352, %v358
      %v361 = vmul.f32 %v353, %v358
      %vm362 = vcmask 1041408
      %v363 = vsel %vm362, %v360, 0.0
      %v364 = vrot.slane %v363, 4
      %v365 = vadd.f32 %v363, %v364
      %v366 = vrot.slane %v365, 2
      %v367 = vadd.f32 %v365, %v366
      %v368 = vrot.slane %v367, 1
      %v369 = vadd.f32 %v367, %v368
      %v370 = vsel %vm362, %v361, 0.0
      %v371 = vrot.slane %v370, 4
      %v372 = vadd.f32 %v370, %v371
      %v373 = vrot.slane %v372, 2
      %v374 = vadd.f32 %v372, %v373
      %v375 = vrot.slane %v374, 1
      %v376 = vadd.f32 %v374, %v375
      %v377 = vld [vmem:[#allocation2] sm:$0x1]
      %379 = vset.pattern.permute.xlu0 0
      %380 = vperm.xlu0 %379, %v377
      %v381 = vpop.permute.xlu0 %380
      %v383 = vlaneseq
      %v384 = vshrl.u32 %v383, 7
      %v385 = vsub.s32 0, %v384
      %v386 = vrot.slane %v381, %v385
      %v387 = vadd.f32 %v369, %v386
      %v388 = vadd.f32 %v376, %v386
      %v389 = vxor.u32 %v387, 2147483648
      %v390 = vxor.u32 %v388, 2147483648
      %v391 = vmul.f32 %v389, 1.442695
      %v392 = vpow.pop %v391
      %v393 = vmul.f32 %v390, 1.442695
      %v394 = vpow.pop %v393
      %v395 = vadd.f32 %v392, 1.0
      %v396 = vadd.f32 %v394, 1.0
      %v397 = vrcp.pop %v395
      %v398 = vmul.f32 1.0, %v397
      %v399 = vrcp.pop %v396
      %v400 = vmul.f32 1.0, %v399
      %v401 = vmul.f32 %v267, %v398
      %v402 = vmul.f32 %v268, %v400
      %v403 = vmul.f32 %v269, %v398
      %v404 = vmul.f32 %v270, %v400
      %405 = vst [vmem:[%s264] sm:$0xff] %v401
      %406 = vst [vmem:[%s264 + $0x8] sm:$0xff] %v402
      %407 = vst [vmem:[%s264 + $0x10] sm:$0xff] %v403
      %408 = vst [vmem:[%s264 + $0x18] sm:$0xff] %v404
      %s409 = smul.u32 2, %s23
      %p410 = scmp.lt.s32.totalorder %s22, 1
      %s411 = scalar_select %p410, %s22, 1
      %p412 = scmp.lt.s32.totalorder %s409, 1
      %s413 = scalar_select %p412, %s409, 1
      %s414 = smul.addr %s411, 4
      %s415 = sadd.s32 %s413, %s414
      %s416 = smul.addr %s415, 8
      %s417 = scalar_lea.vmem %s5, %s416
      // Predicated region
      $region41: #{pa_layer.1} parent=39 // pred_check
        %p418 = pneg %p162
      $region42: #{pa_layer.1} parent=39 // pred_check_branch
        %420 = sbr.rel (%p418) target = $region44
      $region43: #{pa_layer.1} parent=39 // pred_region
        %s421 = smul.u32 2, %s23
      $region44: #{pa_layer.1} parent=39 // pred_fallthru
        _
    $region40: #{pa_layer.1} parent=5 // pred_fallthru
      _
    %p422 = scmp.le.s32.totalorder 2, %s13
    // Predicated region
    $region45: #{pa_layer.1} parent=5 // pred_check
      %p423 = pneg %p422
    $region46: #{pa_layer.1} parent=5 // pred_check_branch
      %425 = sbr.rel (%p423) target = $region48
    $region47: #{pa_layer.1} parent=5 // pred_region
      %s426 = ssub.s32 %s13, 2
      // Predicated region
      $region49: #{pa_layer.1} parent=47 // pred_check
        %p427 = pneg %p168
      $region50: #{pa_layer.1} parent=47 // pred_check_branch
        %429 = sbr.rel (%p427) target = $region52
      $region51: #{pa_layer.1} parent=47 // pred_region
        %s430 = smul.u32 2, %s25
        %p431 = scmp.lt.s32.totalorder %s24, 1
        %s432 = scalar_select %p431, %s24, 1
        %p433 = scmp.lt.s32.totalorder %s430, 1
        %s434 = scalar_select %p433, %s430, 1
        %s435 = smul.addr %s432, 4
        %s436 = sadd.s32 %s434, %s435
        %s437 = smul.addr %s436, 8
        %s438 = scalar_lea.vmem %s5, %s437
      $region52: #{pa_layer.1} parent=47 // pred_fallthru
        _
    $region48: #{pa_layer.1} parent=5 // pred_fallthru
      _
  $region6: #{pa_layer.1} parent=0 // loop_footer
    %s17 = sadd.s32 1, %s13
  $region7: #{pa_layer.1} parent=0 // loop_footer_branch
    %12 = sbr.rel target = $region3
  $region8: #{pa_layer.1} parent=0 // loop_exit
    _

</llo_original>
